<compile_context>
chip_gen: v6e
topology: v6e:2x2x1
jax: 0.10.0
libtpu: 0.0.40
codegen_flags: <defaults>
</compile_context>

<pallas_src>
import functools

import jax
import jax.numpy as jnp
from jax.experimental import pallas as pl
from jax.experimental.pallas import tpu as pltpu


_BLOCK_ELEMS = 512 * 1024               # ~2 MiB of f32 per pipelined block
_MAX_TILE_N = 32                        # static-unroll bound for batch folding
_VMEM_LIMIT_BYTES = 48 * 1024 * 1024    # < 64 MiB physical on v7x; plenty on v5e/v6e


# --------------------------------------------------------------------------
# complex64 <-> interleaved f32 (free bitcast when supported, fused copy else)
# --------------------------------------------------------------------------

def _complex_to_interleaved(x):
    """complex64 (...,) -> f32 (..., 2) with [re, im] on the new minor axis."""
    try:
        return jax.lax.bitcast_convert_type(x, jnp.float32)   # free reinterpret
    except Exception:
        # TODO(synk): lax.bitcast_convert_type rejects complex dtypes on this
        # JAX version; fall back to one fused deinterleave copy.
        return jnp.stack([jnp.real(x), jnp.imag(x)], axis=-1).astype(jnp.float32)


def _interleaved_to_complex(xf2):
    """f32 (..., 2) [re, im] -> complex64 (...)."""
    try:
        return jax.lax.bitcast_convert_type(xf2, jnp.complex64)
    except Exception:
        return jax.lax.complex(xf2[..., 0], xf2[..., 1])


# --------------------------------------------------------------------------
# Tile selection
# --------------------------------------------------------------------------

def _choose_tiles(n, c, m2, block_elems):
    """Pick (tile_n, tile_c, tile_m2) for blocks of (tile_n, tile_c, tile_m2)."""
    # Channel tile: a multiple of 8 dividing C, else all of C (full-dim exemption).
    tile_c = c
    for tc in (32, 16, 8):
        if c % tc == 0:
            tile_c = tc
            break

    # Lane tile along the interleaved spatial axis (2*D*H*W).
    cap_m2 = max(128, (block_elems // max(tile_c, 1)) // 128 * 128)
    if m2 <= cap_m2:
        tile_m2 = m2                    # full dim: no 128 constraint, no tail
    else:
        tile_m2 = cap_m2                # ragged tail handled in-kernel / by Pallas
        if m2 % 128 == 0:
            # Prefer an exact divisor near the cap (no tail) if one exists.
            for tm in range(cap_m2, cap_m2 // 2, -128):
                if m2 % tm == 0:
                    tile_m2 = tm
                    break

    # Fold batch entries into the block when the spatial volume is small so each
    # grid step still moves a large slab (amortizes per-step overhead).
    per_n = tile_c * tile_m2
    tile_n = 1
    for d in range(min(n, _MAX_TILE_N), 0, -1):
        if n % d == 0 and d * per_n <= block_elems:
            tile_n = d
            break
    return tile_n, tile_c, tile_m2


# --------------------------------------------------------------------------
# Pass 1: per-channel sum / sum-of-squares of real and imag parts
# --------------------------------------------------------------------------

def _make_stats_kernel(m2, tile_n, tile_c, tile_m2):
    def kernel(x_ref, out_ref, sr_ref, ssr_ref, si_ref, ssi_ref):
        ni = pl.program_id(2)
        mi = pl.program_id(3)

        @pl.when((ni == 0) & (mi == 0))
        def _init():
            sr_ref[...] = jnp.zeros_like(sr_ref)
            ssr_ref[...] = jnp.zeros_like(ssr_ref)
            si_ref[...] = jnp.zeros_like(si_ref)
            ssi_ref[...] = jnp.zeros_like(ssi_ref)

        # Lane parity + ragged-tail masks (block start is always an even offset).
        lane = jax.lax.broadcasted_iota(jnp.int32, (tile_c, tile_m2), 1)
        m_start = (pl.program_id(0) * pl.num_programs(3) + mi) * tile_m2
        valid = (lane + m_start) < m2            # mask OOB tail lanes (no jnp.pad)
        is_real = (lane & 1) == 0                # even lanes = real, odd = imag

        for t in range(tile_n):                  # static unroll (tile_n is small)
            x = x_ref[t]                         # (tile_c, tile_m2)
            xv = jnp.where(valid, x, 0.0)
            xr = jnp.where(is_real, xv, 0.0)
            xi = xv - xr
            sr_ref[...] += jnp.sum(xr, axis=1, keepdims=True)
            ssr_ref[...] += jnp.sum(xr * xr, axis=1, keepdims=True)
            si_ref[...] += jnp.sum(xi, axis=1, keepdims=True)
            ssi_ref[...] += jnp.sum(xi * xi, axis=1, keepdims=True)

        @pl.when((ni == pl.num_programs(2) - 1) & (mi == pl.num_programs(3) - 1))
        def _finalize():
            out_ref[0] = jnp.concatenate(
                [sr_ref[...], ssr_ref[...], si_ref[...], ssi_ref[...]], axis=1)

    return kernel


def _stats_pass(xf, m2, tile_n, tile_c, tile_m2):
    n, c, _ = xf.shape
    nt = n // tile_n
    ct = c // tile_c
    mt = pl.cdiv(m2, tile_m2)

    # Split the M reduction across both v7x TensorCores only when the channel
    # axis alone cannot keep them busy (harmless bookkeeping on 1-TC chips).
    p = 2 if (ct == 1 and mt >= 2 and mt % 2 == 0) else 1
    mt_p = mt // p

    def x_map(pi, ci, ni, mi):
        return (ni, ci, pi * mt_p + mi)

    def o_map(pi, ci, ni, mi):
        return (pi, ci, 0)

    bytes_accessed = n * c * m2 * 4 + p * c * 4 * 4
    flops = 3 * n * c * m2

    return pl.pallas_call(
        _make_stats_kernel(m2, tile_n, tile_c, tile_m2),
        out_shape=jax.ShapeDtypeStruct((p, c, 4), jnp.float32),
        grid_spec=pltpu.PrefetchScalarGridSpec(
            num_scalar_prefetch=0,
            grid=(p, ct, nt, mt_p),
            in_specs=[pl.BlockSpec((tile_n, tile_c, tile_m2), x_map)],
            out_specs=pl.BlockSpec((1, tile_c, 4), o_map),
            scratch_shapes=[pltpu.VMEM((tile_c, 1), jnp.float32)] * 4,
        ),
        compiler_params=pltpu.CompilerParams(
            dimension_semantics=("parallel", "parallel", "arbitrary", "arbitrary"),
            vmem_limit_bytes=_VMEM_LIMIT_BYTES,
        ),
        cost_estimate=pl.CostEstimate(
            flops=flops, transcendentals=0, bytes_accessed=bytes_accessed),
    )(xf)


# --------------------------------------------------------------------------
# Pass 2: elementwise normalize  y = x * scale + shift  (interleaved re/im)
# --------------------------------------------------------------------------

def _make_norm_kernel(tile_n, tile_c, tile_m2):
    def kernel(coef_ref, x_ref, o_ref):
        coef = coef_ref[...]                              # (tile_c, 4)
        lane = jax.lax.broadcasted_iota(jnp.int32, (tile_c, tile_m2), 1)
        is_real = (lane & 1) == 0
        # Interleaved per-lane coefficients (built once per block).
        scale = jnp.where(is_real, coef[:, 0:1], coef[:, 2:3])   # (tile_c, tile_m2)
        shift = jnp.where(is_real, coef[:, 1:2], coef[:, 3:4])
        for t in range(tile_n):                           # static unroll
            o_ref[t] = x_ref[t] * scale + shift

    return kernel


def _normalize_pass(coef, xf, tile_n, tile_c, tile_m2):
    n, c, m2 = xf.shape
    nt = n // tile_n
    ct = c // tile_c
    mt = pl.cdiv(m2, tile_m2)

    def x_map(ci, ni, mi):
        return (ni, ci, mi)

    def c_map(ci, ni, mi):
        return (ci, 0)

    bytes_accessed = 2 * n * c * m2 * 4 + c * 4 * 4
    flops = 2 * n * c * m2

    return pl.pallas_call(
        _make_norm_kernel(tile_n, tile_c, tile_m2),
        out_shape=jax.ShapeDtypeStruct((n, c, m2), jnp.float32),
        grid_spec=pltpu.PrefetchScalarGridSpec(
            num_scalar_prefetch=0,
            grid=(ct, nt, mt),
            in_specs=[
                pl.BlockSpec((tile_c, 4), c_map),
                pl.BlockSpec((tile_n, tile_c, tile_m2), x_map),
            ],
            out_specs=pl.BlockSpec((tile_n, tile_c, tile_m2), x_map),
        ),
        compiler_params=pltpu.CompilerParams(
            dimension_semantics=("parallel", "parallel", "parallel"),
            vmem_limit_bytes=_VMEM_LIMIT_BYTES,
        ),
        cost_estimate=pl.CostEstimate(
            flops=flops, transcendentals=0, bytes_accessed=bytes_accessed),
    )(coef, xf)


# --------------------------------------------------------------------------
# Public wrapper
# --------------------------------------------------------------------------

def complex_batchnorm3d(x, gamma_r, beta_r, gamma_i, beta_i, *,
                        eps=1e-5, block_elems=None):
    """x: complex64 (N, C, D, H, W).  Returns complex64 (N, C, D, H, W)."""
    if block_elems is None:
        block_elems = _BLOCK_ELEMS
    n, c, d, h, w = x.shape
    m = d * h * w
    m2 = 2 * m

    x = x.astype(jnp.complex64)
    # Interleaved f32 view (re/im along the minor axis); reshapes are free.
    xf = _complex_to_interleaved(x).reshape(n, c, m2)

    tile_n, tile_c, tile_m2 = _choose_tiles(n, c, m2, block_elems)

    # Pass 1: per-channel sums (single read of x).
    stats = _stats_pass(xf, m2, tile_n, tile_c, tile_m2)   # (P, C, 4)
    sums = jnp.sum(stats, axis=0)                          # (C, 4)

    count = float(n * m)                                   # elements per channel/part
    mean_r = sums[:, 0] / count
    var_r = jnp.maximum(sums[:, 1] / count - mean_r * mean_r, 0.0)
    mean_i = sums[:, 2] / count
    var_i = jnp.maximum(sums[:, 3] / count - mean_i * mean_i, 0.0)

    scale_r = gamma_r.astype(jnp.float32) * jax.lax.rsqrt(var_r + eps)
    shift_r = beta_r.astype(jnp.float32) - mean_r * scale_r
    scale_i = gamma_i.astype(jnp.float32) * jax.lax.rsqrt(var_i + eps)
    shift_i = beta_i.astype(jnp.float32) - mean_i * scale_i
    coef = jnp.stack([scale_r, shift_r, scale_i, shift_i], axis=-1)   # (C, 4)

    # Pass 2: fused scale/shift (one read + one write of x).
    yf = _normalize_pass(coef, xf, tile_n, tile_c, tile_m2)           # (N, C, 2M)
    return _interleaved_to_complex(yf.reshape(n, c, d, h, w, 2))


# --------------------------------------------------------------------------
# Reference + self-test
# --------------------------------------------------------------------------

def _reference(x, gamma_r, beta_r, gamma_i, beta_i, eps=1e-5):
    def bn(part, g, b):
        part = part.astype(jnp.float32)
        axes = (0, 2, 3, 4)
        mean = jnp.mean(part, axis=axes, keepdims=True)
        var = jnp.mean(jnp.square(part - mean), axis=axes, keepdims=True)
        return ((part - mean) * jax.lax.rsqrt(var + eps)
                * g.reshape(1, -1, 1, 1, 1) + b.reshape(1, -1, 1, 1, 1))

    return (bn(jnp.real(x), gamma_r, beta_r)
            + 1j * bn(jnp.imag(x), gamma_i, beta_i)).astype(jnp.complex64)


if __name__ == "__main__":
    key = jax.random.PRNGKey(0)

    def run_case(shape, block_elems=None):
        n_, c_ = shape[0], shape[1]
        case_key = jax.random.fold_in(key, shape[0] * 1000 + shape[1])
        k1, k2, k3, k4, k5, k6 = jax.random.split(case_key, 6)
        x = (jax.random.normal(k1, shape, jnp.float32)
             + 1j * jax.random.normal(k2, shape, jnp.float32)).astype(jnp.complex64)
        gamma_r = 1.0 + 0.1 * jax.random.normal(k3, (c_,), jnp.float32)
        beta_r = 0.1 * jax.random.normal(k4, (c_,), jnp.float32)
        gamma_i = 1.0 + 0.1 * jax.random.normal(k5, (c_,), jnp.float32)
        beta_i = 0.1 * jax.random.normal(k6, (c_,), jnp.float32)

        fwd = jax.jit(functools.partial(
            complex_batchnorm3d, eps=1e-5, block_elems=block_elems))
        y = jax.block_until_ready(fwd(x, gamma_r, beta_r, gamma_i, beta_i))

        y_ref = _reference(x, gamma_r, beta_r, gamma_i, beta_i)
        assert y.shape == shape and y.dtype == jnp.complex64
        assert jnp.allclose(jnp.real(y), jnp.real(y_ref), atol=1e-4, rtol=1e-4)
        assert jnp.allclose(jnp.imag(y), jnp.imag(y_ref), atol=1e-4, rtol=1e-4)

    # Single-block fast path (N folded into the block).
    run_case((2, 4, 4, 8, 8))
    # Multi-step reduction + ragged (non-128) spatial tail + megacore split.
    run_case((2, 16, 3, 5, 7), block_elems=2048)
    # Multiple channel blocks (tile_c = 8 < C).
    run_case((1, 24, 2, 4, 6))

    print("KERNEL_OK")
</pallas_src>

<mosaic_0001>
module attributes {stable_mosaic.version = 11 : i64} {
  func.func @kernel(%arg0: i32, %arg1: i32, %arg2: i32, %arg3: i32, %arg4: memref<2x4x512xf32, #tpu.memory_space<vmem>>, %arg5: memref<1x4x4xf32, #tpu.memory_space<vmem>>, %arg6: memref<4x1xf32, #tpu.memory_space<vmem>>, %arg7: memref<4x1xf32, #tpu.memory_space<vmem>>, %arg8: memref<4x1xf32, #tpu.memory_space<vmem>>, %arg9: memref<4x1xf32, #tpu.memory_space<vmem>>) attributes {dimension_semantics = [#tpu.dimension_semantics<parallel>, #tpu.dimension_semantics<parallel>, #tpu.dimension_semantics<arbitrary>, #tpu.dimension_semantics<arbitrary>], iteration_bounds = array<i64: 1, 1, 1, 1>, scalar_prefetch = 0 : i64, scratch_operands = 4 : i64, tpu.core_type = #tpu.core_type<tc>, window_params = [{transform_indices = @transform_0, window_bounds = array<i64: 2, 4, 512>}, {transform_indices = @transform_1, window_bounds = array<i64: 1, 4, 4>}]} {
    %c0_i32 = arith.constant 0 : i32
    %0 = arith.cmpi eq, %arg2, %c0_i32 : i32
    %c0_i32_0 = arith.constant 0 : i32
    %1 = arith.cmpi eq, %arg3, %c0_i32_0 : i32
    %2 = arith.andi %0, %1 : i1
    %3 = arith.extui %2 : i1 to i32
    %c0_i32_1 = arith.constant 0 : i32
    %4 = arith.cmpi ne, %3, %c0_i32_1 : i32
    scf.if %4 {
      %cst_55 = arith.constant 0.000000e+00 : f32
      %80 = vector.broadcast %cst_55 : f32 to vector<4x1xf32>
      %c0_56 = arith.constant 0 : index
      %c0_57 = arith.constant 0 : index
      %81 = vector.load %arg6[%c0_56, %c0_57] : memref<4x1xf32, #tpu.memory_space<vmem>>, vector<4x1xf32>
      tpu.vector_store %arg6[%c0_56, %c0_57], %80 {strides = array<i32>} : memref<4x1xf32, #tpu.memory_space<vmem>>, vector<4x1xf32>,
      %cst_58 = arith.constant 0.000000e+00 : f32
      %82 = vector.broadcast %cst_58 : f32 to vector<4x1xf32>
      %c0_59 = arith.constant 0 : index
      %c0_60 = arith.constant 0 : index
      %83 = vector.load %arg7[%c0_59, %c0_60] : memref<4x1xf32, #tpu.memory_space<vmem>>, vector<4x1xf32>
      tpu.vector_store %arg7[%c0_59, %c0_60], %82 {strides = array<i32>} : memref<4x1xf32, #tpu.memory_space<vmem>>, vector<4x1xf32>,
      %cst_61 = arith.constant 0.000000e+00 : f32
      %84 = vector.broadcast %cst_61 : f32 to vector<4x1xf32>
      %c0_62 = arith.constant 0 : index
      %c0_63 = arith.constant 0 : index
      %85 = vector.load %arg8[%c0_62, %c0_63] : memref<4x1xf32, #tpu.memory_space<vmem>>, vector<4x1xf32>
      tpu.vector_store %arg8[%c0_62, %c0_63], %84 {strides = array<i32>} : memref<4x1xf32, #tpu.memory_space<vmem>>, vector<4x1xf32>,
      %cst_64 = arith.constant 0.000000e+00 : f32
      %86 = vector.broadcast %cst_64 : f32 to vector<4x1xf32>
      %c0_65 = arith.constant 0 : index
      %c0_66 = arith.constant 0 : index
      %87 = vector.load %arg9[%c0_65, %c0_66] : memref<4x1xf32, #tpu.memory_space<vmem>>, vector<4x1xf32>
      tpu.vector_store %arg9[%c0_65, %c0_66], %86 {strides = array<i32>} : memref<4x1xf32, #tpu.memory_space<vmem>>, vector<4x1xf32>,
    } else {
    }
    %5 = tpu.iota {dimensions = array<i32: 1>} : vector<4x512xi32>
    %c1_i32 = arith.constant 1 : i32
    %6 = arith.muli %arg0, %c1_i32 : i32
    %7 = arith.addi %6, %arg3 : i32
    %c512_i32 = arith.constant 512 : i32
    %8 = arith.muli %7, %c512_i32 : i32
    %9 = vector.broadcast %8 : i32 to vector<4x512xi32>
    %10 = arith.addi %5, %9 : vector<4x512xi32>
    %c512_i32_2 = arith.constant 512 : i32
    %11 = vector.broadcast %c512_i32_2 : i32 to vector<4x512xi32>
    %12 = arith.cmpi slt, %10, %11 : vector<4x512xi32>
    %c1_i32_3 = arith.constant 1 : i32
    %13 = vector.broadcast %c1_i32_3 : i32 to vector<4x512xi32>
    %14 = arith.andi %5, %13 : vector<4x512xi32>
    %c0_i32_4 = arith.constant 0 : i32
    %15 = vector.broadcast %c0_i32_4 : i32 to vector<4x512xi32>
    %16 = arith.cmpi eq, %14, %15 : vector<4x512xi32>
    %c0 = arith.constant 0 : index
    %c0_5 = arith.constant 0 : index
    %c0_6 = arith.constant 0 : index
    %17 = vector.load %arg4[%c0, %c0_5, %c0_6] : memref<2x4x512xf32, #tpu.memory_space<vmem>>, vector<1x4x512xf32>
    %18 = vector.shape_cast %17 : vector<1x4x512xf32> to vector<4x512xf32>
    %cst = arith.constant 0.000000e+00 : f32
    %19 = vector.broadcast %cst : f32 to vector<4x512xf32>
    %20 = arith.select %12, %18, %19 : vector<4x512xi1>, vector<4x512xf32>
    %cst_7 = arith.constant 0.000000e+00 : f32
    %21 = vector.broadcast %cst_7 : f32 to vector<4x512xf32>
    %22 = arith.select %16, %20, %21 : vector<4x512xi1>, vector<4x512xf32>
    %23 = arith.subf %20, %22 : vector<4x512xf32>
    %c0_8 = arith.constant 0 : index
    %c0_9 = arith.constant 0 : index
    %24 = vector.load %arg6[%c0_8, %c0_9] : memref<4x1xf32, #tpu.memory_space<vmem>>, vector<4x1xf32>
    %cst_10 = arith.constant dense<0.000000e+00> : vector<4xf32>
    %25 = vector.multi_reduction <add>, %22, %cst_10 [1] : vector<4x512xf32> to vector<4xf32>
    %26 = vector.shape_cast %25 : vector<4xf32> to vector<4x1xf32>
    %27 = arith.addf %24, %26 : vector<4x1xf32>
    %c0_11 = arith.constant 0 : index
    %c0_12 = arith.constant 0 : index
    %28 = vector.load %arg6[%c0_11, %c0_12] : memref<4x1xf32, #tpu.memory_space<vmem>>, vector<4x1xf32>
    tpu.vector_store %arg6[%c0_11, %c0_12], %27 {strides = array<i32>} : memref<4x1xf32, #tpu.memory_space<vmem>>, vector<4x1xf32>,
    %c0_13 = arith.constant 0 : index
    %c0_14 = arith.constant 0 : index
    %29 = vector.load %arg7[%c0_13, %c0_14] : memref<4x1xf32, #tpu.memory_space<vmem>>, vector<4x1xf32>
    %30 = arith.mulf %22, %22 : vector<4x512xf32>
    %cst_15 = arith.constant dense<0.000000e+00> : vector<4xf32>
    %31 = vector.multi_reduction <add>, %30, %cst_15 [1] : vector<4x512xf32> to vector<4xf32>
    %32 = vector.shape_cast %31 : vector<4xf32> to vector<4x1xf32>
    %33 = arith.addf %29, %32 : vector<4x1xf32>
    %c0_16 = arith.constant 0 : index
    %c0_17 = arith.constant 0 : index
    %34 = vector.load %arg7[%c0_16, %c0_17] : memref<4x1xf32, #tpu.memory_space<vmem>>, vector<4x1xf32>
    tpu.vector_store %arg7[%c0_16, %c0_17], %33 {strides = array<i32>} : memref<4x1xf32, #tpu.memory_space<vmem>>, vector<4x1xf32>,
    %c0_18 = arith.constant 0 : index
    %c0_19 = arith.constant 0 : index
    %35 = vector.load %arg8[%c0_18, %c0_19] : memref<4x1xf32, #tpu.memory_space<vmem>>, vector<4x1xf32>
    %cst_20 = arith.constant dense<0.000000e+00> : vector<4xf32>
    %36 = vector.multi_reduction <add>, %23, %cst_20 [1] : vector<4x512xf32> to vector<4xf32>
    %37 = vector.shape_cast %36 : vector<4xf32> to vector<4x1xf32>
    %38 = arith.addf %35, %37 : vector<4x1xf32>
    %c0_21 = arith.constant 0 : index
    %c0_22 = arith.constant 0 : index
    %39 = vector.load %arg8[%c0_21, %c0_22] : memref<4x1xf32, #tpu.memory_space<vmem>>, vector<4x1xf32>
    tpu.vector_store %arg8[%c0_21, %c0_22], %38 {strides = array<i32>} : memref<4x1xf32, #tpu.memory_space<vmem>>, vector<4x1xf32>,
    %c0_23 = arith.constant 0 : index
    %c0_24 = arith.constant 0 : index
    %40 = vector.load %arg9[%c0_23, %c0_24] : memref<4x1xf32, #tpu.memory_space<vmem>>, vector<4x1xf32>
    %41 = arith.mulf %23, %23 : vector<4x512xf32>
    %cst_25 = arith.constant dense<0.000000e+00> : vector<4xf32>
    %42 = vector.multi_reduction <add>, %41, %cst_25 [1] : vector<4x512xf32> to vector<4xf32>
    %43 = vector.shape_cast %42 : vector<4xf32> to vector<4x1xf32>
    %44 = arith.addf %40, %43 : vector<4x1xf32>
    %c0_26 = arith.constant 0 : index
    %c0_27 = arith.constant 0 : index
    %45 = vector.load %arg9[%c0_26, %c0_27] : memref<4x1xf32, #tpu.memory_space<vmem>>, vector<4x1xf32>
    tpu.vector_store %arg9[%c0_26, %c0_27], %44 {strides = array<i32>} : memref<4x1xf32, #tpu.memory_space<vmem>>, vector<4x1xf32>,
    %c1 = arith.constant 1 : index
    %c0_28 = arith.constant 0 : index
    %c0_29 = arith.constant 0 : index
    %46 = vector.load %arg4[%c1, %c0_28, %c0_29] : memref<2x4x512xf32, #tpu.memory_space<vmem>>, vector<1x4x512xf32>
    %47 = vector.shape_cast %46 : vector<1x4x512xf32> to vector<4x512xf32>
    %cst_30 = arith.constant 0.000000e+00 : f32
    %48 = vector.broadcast %cst_30 : f32 to vector<4x512xf32>
    %49 = arith.select %12, %47, %48 : vector<4x512xi1>, vector<4x512xf32>
    %cst_31 = arith.constant 0.000000e+00 : f32
    %50 = vector.broadcast %cst_31 : f32 to vector<4x512xf32>
    %51 = arith.select %16, %49, %50 : vector<4x512xi1>, vector<4x512xf32>
    %52 = arith.subf %49, %51 : vector<4x512xf32>
    %c0_32 = arith.constant 0 : index
    %c0_33 = arith.constant 0 : index
    %53 = vector.load %arg6[%c0_32, %c0_33] : memref<4x1xf32, #tpu.memory_space<vmem>>, vector<4x1xf32>
    %cst_34 = arith.constant dense<0.000000e+00> : vector<4xf32>
    %54 = vector.multi_reduction <add>, %51, %cst_34 [1] : vector<4x512xf32> to vector<4xf32>
    %55 = vector.shape_cast %54 : vector<4xf32> to vector<4x1xf32>
    %56 = arith.addf %53, %55 : vector<4x1xf32>
    %c0_35 = arith.constant 0 : index
    %c0_36 = arith.constant 0 : index
    %57 = vector.load %arg6[%c0_35, %c0_36] : memref<4x1xf32, #tpu.memory_space<vmem>>, vector<4x1xf32>
    tpu.vector_store %arg6[%c0_35, %c0_36], %56 {strides = array<i32>} : memref<4x1xf32, #tpu.memory_space<vmem>>, vector<4x1xf32>,
    %c0_37 = arith.constant 0 : index
    %c0_38 = arith.constant 0 : index
    %58 = vector.load %arg7[%c0_37, %c0_38] : memref<4x1xf32, #tpu.memory_space<vmem>>, vector<4x1xf32>
    %59 = arith.mulf %51, %51 : vector<4x512xf32>
    %cst_39 = arith.constant dense<0.000000e+00> : vector<4xf32>
    %60 = vector.multi_reduction <add>, %59, %cst_39 [1] : vector<4x512xf32> to vector<4xf32>
    %61 = vector.shape_cast %60 : vector<4xf32> to vector<4x1xf32>
    %62 = arith.addf %58, %61 : vector<4x1xf32>
    %c0_40 = arith.constant 0 : index
    %c0_41 = arith.constant 0 : index
    %63 = vector.load %arg7[%c0_40, %c0_41] : memref<4x1xf32, #tpu.memory_space<vmem>>, vector<4x1xf32>
    tpu.vector_store %arg7[%c0_40, %c0_41], %62 {strides = array<i32>} : memref<4x1xf32, #tpu.memory_space<vmem>>, vector<4x1xf32>,
    %c0_42 = arith.constant 0 : index
    %c0_43 = arith.constant 0 : index
    %64 = vector.load %arg8[%c0_42, %c0_43] : memref<4x1xf32, #tpu.memory_space<vmem>>, vector<4x1xf32>
    %cst_44 = arith.constant dense<0.000000e+00> : vector<4xf32>
    %65 = vector.multi_reduction <add>, %52, %cst_44 [1] : vector<4x512xf32> to vector<4xf32>
    %66 = vector.shape_cast %65 : vector<4xf32> to vector<4x1xf32>
    %67 = arith.addf %64, %66 : vector<4x1xf32>
    %c0_45 = arith.constant 0 : index
    %c0_46 = arith.constant 0 : index
    %68 = vector.load %arg8[%c0_45, %c0_46] : memref<4x1xf32, #tpu.memory_space<vmem>>, vector<4x1xf32>
    tpu.vector_store %arg8[%c0_45, %c0_46], %67 {strides = array<i32>} : memref<4x1xf32, #tpu.memory_space<vmem>>, vector<4x1xf32>,
    %c0_47 = arith.constant 0 : index
    %c0_48 = arith.constant 0 : index
    %69 = vector.load %arg9[%c0_47, %c0_48] : memref<4x1xf32, #tpu.memory_space<vmem>>, vector<4x1xf32>
    %70 = arith.mulf %52, %52 : vector<4x512xf32>
    %cst_49 = arith.constant dense<0.000000e+00> : vector<4xf32>
    %71 = vector.multi_reduction <add>, %70, %cst_49 [1] : vector<4x512xf32> to vector<4xf32>
    %72 = vector.shape_cast %71 : vector<4xf32> to vector<4x1xf32>
    %73 = arith.addf %69, %72 : vector<4x1xf32>
    %c0_50 = arith.constant 0 : index
    %c0_51 = arith.constant 0 : index
    %74 = vector.load %arg9[%c0_50, %c0_51] : memref<4x1xf32, #tpu.memory_space<vmem>>, vector<4x1xf32>
    tpu.vector_store %arg9[%c0_50, %c0_51], %73 {strides = array<i32>} : memref<4x1xf32, #tpu.memory_space<vmem>>, vector<4x1xf32>,
    %c0_i32_52 = arith.constant 0 : i32
    %75 = arith.cmpi eq, %arg2, %c0_i32_52 : i32
    %c0_i32_53 = arith.constant 0 : i32
    %76 = arith.cmpi eq, %arg3, %c0_i32_53 : i32
    %77 = arith.andi %75, %76 : i1
    %78 = arith.extui %77 : i1 to i32
    %c0_i32_54 = arith.constant 0 : i32
    %79 = arith.cmpi ne, %78, %c0_i32_54 : i32
    scf.if %79 {
      %c0_55 = arith.constant 0 : index
      %c0_56 = arith.constant 0 : index
      %80 = vector.load %arg6[%c0_55, %c0_56] : memref<4x1xf32, #tpu.memory_space<vmem>>, vector<4x1xf32>
      %c0_57 = arith.constant 0 : index
      %c0_58 = arith.constant 0 : index
      %81 = vector.load %arg7[%c0_57, %c0_58] : memref<4x1xf32, #tpu.memory_space<vmem>>, vector<4x1xf32>
      %c0_59 = arith.constant 0 : index
      %c0_60 = arith.constant 0 : index
      %82 = vector.load %arg8[%c0_59, %c0_60] : memref<4x1xf32, #tpu.memory_space<vmem>>, vector<4x1xf32>
      %c0_61 = arith.constant 0 : index
      %c0_62 = arith.constant 0 : index
      %83 = vector.load %arg9[%c0_61, %c0_62] : memref<4x1xf32, #tpu.memory_space<vmem>>, vector<4x1xf32>
      %84 = tpu.concatenate %80, %81, %82, %83 in 1 : vector<4x1xf32>, vector<4x1xf32>, vector<4x1xf32>, vector<4x1xf32> -> vector<4x4xf32>
      %c0_63 = arith.constant 0 : index
      %c0_64 = arith.constant 0 : index
      %c0_65 = arith.constant 0 : index
      %85 = vector.load %arg5[%c0_63, %c0_64, %c0_65] : memref<1x4x4xf32, #tpu.memory_space<vmem>>, vector<1x4x4xf32>
      %86 = vector.shape_cast %85 : vector<1x4x4xf32> to vector<4x4xf32>
      %87 = vector.shape_cast %84 : vector<4x4xf32> to vector<1x4x4xf32>
      tpu.vector_store %arg5[%c0_63, %c0_64, %c0_65], %87 {strides = array<i32>} : memref<1x4x4xf32, #tpu.memory_space<vmem>>, vector<1x4x4xf32>,
    } else {
    }
    return
  }
  func.func @transform_0(%arg0: i32, %arg1: i32, %arg2: i32, %arg3: i32) -> (i32, i32, i32) {
    %c1_i32 = arith.constant 1 : i32
    %0 = arith.muli %arg0, %c1_i32 : i32
    %1 = arith.addi %0, %arg3 : i32
    %c0_i32 = arith.constant 0 : i32
    return %arg2, %arg1, %1 : i32, i32, i32
  }
  func.func @transform_1(%arg0: i32, %arg1: i32, %arg2: i32, %arg3: i32) -> (i32, i32, i32) {
    %c0_i32 = arith.constant 0 : i32
    %c0_i32_0 = arith.constant 0 : i32
    return %arg0, %arg1, %c0_i32 : i32, i32, i32
  }
}

module attributes {stable_mosaic.version = 11 : i64} {
  func.func @kernel(%arg0: i32, %arg1: i32, %arg2: i32, %arg3: memref<4x4xf32, #tpu.memory_space<vmem>>, %arg4: memref<2x4x512xf32, #tpu.memory_space<vmem>>, %arg5: memref<2x4x512xf32, #tpu.memory_space<vmem>>) attributes {dimension_semantics = [#tpu.dimension_semantics<parallel>, #tpu.dimension_semantics<parallel>, #tpu.dimension_semantics<parallel>], iteration_bounds = array<i64: 1, 1, 1>, scalar_prefetch = 0 : i64, scratch_operands = 0 : i64, tpu.core_type = #tpu.core_type<tc>, window_params = [{transform_indices = @transform_0, window_bounds = array<i64: 4, 4>}, {transform_indices = @transform_1, window_bounds = array<i64: 2, 4, 512>}, {transform_indices = @transform_2, window_bounds = array<i64: 2, 4, 512>}]} {
    %c0 = arith.constant 0 : index
    %c0_0 = arith.constant 0 : index
    %0 = vector.load %arg3[%c0, %c0_0] : memref<4x4xf32, #tpu.memory_space<vmem>>, vector<4x4xf32>
    %1 = tpu.iota {dimensions = array<i32: 1>} : vector<4x512xi32>
    %c1_i32 = arith.constant 1 : i32
    %2 = vector.broadcast %c1_i32 : i32 to vector<4x512xi32>
    %3 = arith.andi %1, %2 : vector<4x512xi32>
    %c0_i32 = arith.constant 0 : i32
    %4 = vector.broadcast %c0_i32 : i32 to vector<4x512xi32>
    %5 = arith.cmpi eq, %3, %4 : vector<4x512xi32>
    %6 = vector.extract_strided_slice %0 {offsets = [0, 0], sizes = [4, 1], strides = [1, 1]} : vector<4x4xf32> to vector<4x1xf32>
    %7 = vector.extract_strided_slice %0 {offsets = [0, 2], sizes = [4, 1], strides = [1, 1]} : vector<4x4xf32> to vector<4x1xf32>
    %8 = vector.shape_cast %6 : vector<4x1xf32> to vector<4x1xf32>
    %9 = vector.broadcast %8 : vector<4x1xf32> to vector<4x512xf32>
    %10 = vector.shape_cast %7 : vector<4x1xf32> to vector<4x1xf32>
    %11 = vector.broadcast %10 : vector<4x1xf32> to vector<4x512xf32>
    %12 = arith.select %5, %9, %11 : vector<4x512xi1>, vector<4x512xf32>
    %13 = vector.extract_strided_slice %0 {offsets = [0, 1], sizes = [4, 1], strides = [1, 1]} : vector<4x4xf32> to vector<4x1xf32>
    %14 = vector.extract_strided_slice %0 {offsets = [0, 3], sizes = [4, 1], strides = [1, 1]} : vector<4x4xf32> to vector<4x1xf32>
    %15 = vector.shape_cast %13 : vector<4x1xf32> to vector<4x1xf32>
    %16 = vector.broadcast %15 : vector<4x1xf32> to vector<4x512xf32>
    %17 = vector.shape_cast %14 : vector<4x1xf32> to vector<4x1xf32>
    %18 = vector.broadcast %17 : vector<4x1xf32> to vector<4x512xf32>
    %19 = arith.select %5, %16, %18 : vector<4x512xi1>, vector<4x512xf32>
    %c0_1 = arith.constant 0 : index
    %c0_2 = arith.constant 0 : index
    %c0_3 = arith.constant 0 : index
    %20 = vector.load %arg4[%c0_1, %c0_2, %c0_3] : memref<2x4x512xf32, #tpu.memory_space<vmem>>, vector<1x4x512xf32>
    %21 = vector.shape_cast %20 : vector<1x4x512xf32> to vector<4x512xf32>
    %22 = arith.mulf %21, %12 : vector<4x512xf32>
    %23 = arith.addf %22, %19 : vector<4x512xf32>
    %c0_4 = arith.constant 0 : index
    %c0_5 = arith.constant 0 : index
    %c0_6 = arith.constant 0 : index
    %24 = vector.load %arg5[%c0_4, %c0_5, %c0_6] : memref<2x4x512xf32, #tpu.memory_space<vmem>>, vector<1x4x512xf32>
    %25 = vector.shape_cast %24 : vector<1x4x512xf32> to vector<4x512xf32>
    %26 = vector.shape_cast %23 : vector<4x512xf32> to vector<1x4x512xf32>
    tpu.vector_store %arg5[%c0_4, %c0_5, %c0_6], %26 {strides = array<i32>} : memref<2x4x512xf32, #tpu.memory_space<vmem>>, vector<1x4x512xf32>,
    %c1 = arith.constant 1 : index
    %c0_7 = arith.constant 0 : index
    %c0_8 = arith.constant 0 : index
    %27 = vector.load %arg4[%c1, %c0_7, %c0_8] : memref<2x4x512xf32, #tpu.memory_space<vmem>>, vector<1x4x512xf32>
    %28 = vector.shape_cast %27 : vector<1x4x512xf32> to vector<4x512xf32>
    %29 = arith.mulf %28, %12 : vector<4x512xf32>
    %30 = arith.addf %29, %19 : vector<4x512xf32>
    %c1_9 = arith.constant 1 : index
    %c0_10 = arith.constant 0 : index
    %c0_11 = arith.constant 0 : index
    %31 = vector.load %arg5[%c1_9, %c0_10, %c0_11] : memref<2x4x512xf32, #tpu.memory_space<vmem>>, vector<1x4x512xf32>
    %32 = vector.shape_cast %31 : vector<1x4x512xf32> to vector<4x512xf32>
    %33 = vector.shape_cast %30 : vector<4x512xf32> to vector<1x4x512xf32>
    tpu.vector_store %arg5[%c1_9, %c0_10, %c0_11], %33 {strides = array<i32>} : memref<2x4x512xf32, #tpu.memory_space<vmem>>, vector<1x4x512xf32>,
    return
  }
  func.func @transform_0(%arg0: i32, %arg1: i32, %arg2: i32) -> (i32, i32) {
    %c0_i32 = arith.constant 0 : i32
    %c0_i32_0 = arith.constant 0 : i32
    return %arg0, %c0_i32 : i32, i32
  }
  func.func @transform_1(%arg0: i32, %arg1: i32, %arg2: i32) -> (i32, i32, i32) {
    %c0_i32 = arith.constant 0 : i32
    return %arg1, %arg0, %arg2 : i32, i32, i32
  }
  func.func @transform_2(%arg0: i32, %arg1: i32, %arg2: i32) -> (i32, i32, i32) {
    %c0_i32 = arith.constant 0 : i32
    return %arg1, %arg0, %arg2 : i32, i32, i32
  }
}

</mosaic_0001>

<llo_original>
// kernel: custom-call
$region0: #{custom-call}
  %s0 = inlined_call_operand.hbm [shape: c64[2,4,4,8,8], index: 0, kind: input, shape index: {}]
  %s1 = inlined_call_operand.vmem [shape: f32[2,4,4,8,8], index: 1, kind: output, shape index: {}]
  $region1: #{custom-call} parent=0
    #allocation0 [shape = 's32[1]{0}', space=sflag, size = 0x4, scoped, tag = 'scoped memory for custom-call']
    %2 = vsyncpa [#allocation0], 0
    %s3 = sshll.u32 %s1, 4
    %s4 = int_to_ptr.vmem [resolvable:$true] %s3
    %6 = dma.hbm_to_vmem [thread:$0]  %s0, 4096, %s4, [#allocation0]
    %7 = dma.done [#allocation0], 4096
    %8 = vsyncpa [#allocation0], 1

// kernel: custom-call.1
$region0: #{custom-call.1}
  %s0 = inlined_call_operand.hbm [shape: c64[2,4,4,8,8], index: 0, kind: input, shape index: {}]
  %s1 = inlined_call_operand.vmem [shape: f32[2,4,4,8,8], index: 1, kind: output, shape index: {}]
  %s2 = scalar_lea.hbm %s0, 4096
  $region1: #{custom-call.1} parent=0
    #allocation0 [shape = 's32[1]{0}', space=sflag, size = 0x4, scoped, tag = 'scoped memory for custom-call.1']
    %3 = vsyncpa [#allocation0], 0
    %s4 = sshll.u32 %s1, 4
    %s5 = int_to_ptr.vmem [resolvable:$true] %s4
    %7 = dma.hbm_to_vmem [thread:$0]  %s2, 4096, %s5, [#allocation0]
    %8 = dma.done [#allocation0], 4096
    %9 = vsyncpa [#allocation0], 1

// kernel: complex_batchnorm3d.3
$region0: #{complex_batchnorm3d.3}
  #allocation0 [shape = 'u32[]', space=smem, size = 0x4, offset = 0x4, fixed_abs, tag = 'smem constant byte address 0x4 - core index']
  #allocation1 [shape = 'u32[144,128]{1,0:T(1,128)}', space=vmem, size = 0x12000, scoped, tag = 'internal scratch']
  %s0 = inlined_call_operand.vmem [shape: f32[4,4], index: 0, kind: input, shape index: {}]
  %s1 = inlined_call_operand.vmem [shape: f32[2,4,512], index: 1, kind: input, shape index: {}]
  %s2 = inlined_call_operand.vmem [shape: f32[2,4,512], index: 2, kind: output, shape index: {}]
  %s3 = sld [smem:[#allocation0]]
  $region18: #{complex_batchnorm3d.3} parent=0
    _
  %s5 = ssub.s32 1, %s3
  %s6 = scalar_select 0, %s5, %s3
  // Predicated region
  $region2: #{complex_batchnorm3d.3} parent=0 // pred_check
    _
  $region3: #{complex_batchnorm3d.3} parent=0 // pred_check_branch
    %8 = sbr.rel (0) target = $region5
  $region4: #{complex_batchnorm3d.3} parent=0 // pred_region
    _
  $region5: #{complex_batchnorm3d.3} parent=0 // pred_fallthru
    _
  // Predicated region
  $region6: #{complex_batchnorm3d.3} parent=0 // pred_check
    _
  $region7: #{complex_batchnorm3d.3} parent=0 // pred_check_branch
    %10 = sbr.rel (0) target = $region9
  $region8: #{complex_batchnorm3d.3} parent=0 // pred_region
    _
  $region9: #{complex_batchnorm3d.3} parent=0 // pred_fallthru
    _
  %v11 = vld [vmem:[%s0] sm:$0xf]
  %v12 = vlaneseq
  %v13 = vand.u32 %v12, 127
  %v14 = vadd.s32 %v13, 128
  %v15 = vadd.s32 %v13, 256
  %v16 = vadd.s32 %v13, 384
  %v17 = vand.u32 %v13, 1
  %v18 = vand.u32 %v14, 1
  %v19 = vand.u32 %v15, 1
  %v20 = vand.u32 %v16, 1
  %vm21 = vcmp.eq.s32.totalorder %v17, 0
  %vm22 = vcmp.eq.s32.totalorder %v18, 0
  %vm23 = vcmp.eq.s32.totalorder %v19, 0
  %vm24 = vcmp.eq.s32.totalorder %v20, 0
  %26 = vset.pattern.permute.xlu0 0
  %27 = vperm.xlu0 %26, %v11
  %v28 = vpop.permute.xlu0 %27
  %30 = vset.pattern.permute.xlu0 2
  %31 = vperm.xlu0 %30, %v11
  %v32 = vpop.permute.xlu0 %31
  %v34 = vsel %vm21, %v28, %v32
  %v35 = vsel %vm22, %v28, %v32
  %v36 = vsel %vm23, %v28, %v32
  %v37 = vsel %vm24, %v28, %v32
  %38 = vset.pattern.permute.xlu0 1
  %39 = vperm.xlu0 %38, %v11
  %v40 = vpop.permute.xlu0 %39
  %42 = vset.pattern.permute.xlu0 3
  %43 = vperm.xlu0 %42, %v11
  %v44 = vpop.permute.xlu0 %43
  %v46 = vsel %vm21, %v40, %v44
  %v47 = vsel %vm22, %v40, %v44
  %v48 = vsel %vm23, %v40, %v44
  %v49 = vsel %vm24, %v40, %v44
  %v50 = vld [vmem:[%s1] sm:$0xff]
  %v51 = vld [vmem:[%s1 + $0x8] sm:$0xff]
  %v56 = vcombine.low %v34, %v35
  %v57 = vcombine.low %v36, %v37
  %v60 = vmul.f32 %v50, %v56
  %v61 = vmul.f32 %v51, %v57
  %v66 = vcombine.low %v46, %v47
  %v67 = vcombine.low %v48, %v49
  %v70 = vadd.f32 %v60, %v66
  %v71 = vadd.f32 %v61, %v67
  %72 = vst [vmem:[%s2] sm:$0xff] %v70
  %73 = vst [vmem:[%s2 + $0x8] sm:$0xff] %v71
  %s74 = scalar_lea.vmem %s1, 16
  %v75 = vld [vmem:[%s74] sm:$0xff]
  %v76 = vld [vmem:[%s74 + $0x8] sm:$0xff]
  %v77 = vmul.f32 %v75, %v56
  %v78 = vmul.f32 %v76, %v57
  %v79 = vadd.f32 %v77, %v66
  %v80 = vadd.f32 %v78, %v67
  %s81 = scalar_lea.vmem %s2, 16
  %82 = vst [vmem:[%s81] sm:$0xff] %v79
  %83 = vst [vmem:[%s81 + $0x8] sm:$0xff] %v80
  // Predicated region
  $region10: #{complex_batchnorm3d.3} parent=0 // pred_check
    _
  $region11: #{complex_batchnorm3d.3} parent=0 // pred_check_branch
    %85 = sbr.rel (0) target = $region13
  $region12: #{complex_batchnorm3d.3} parent=0 // pred_region
    _
  $region13: #{complex_batchnorm3d.3} parent=0 // pred_fallthru
    _
  // Predicated region
  $region14: #{complex_batchnorm3d.3} parent=0 // pred_check
    _
  $region15: #{complex_batchnorm3d.3} parent=0 // pred_check_branch
    %87 = sbr.rel (0) target = $region17
  $region16: #{complex_batchnorm3d.3} parent=0 // pred_region
    _
  $region17: #{complex_batchnorm3d.3} parent=0 // pred_fallthru
    _

// kernel: complex_batchnorm3d.2
$region0: #{complex_batchnorm3d.2}
  #allocation0 [shape = 'u32[]', space=smem, size = 0x4, offset = 0x4, fixed_abs, tag = 'smem constant byte address 0x4 - core index']
  #allocation1 [shape = 'u32[144,128]{1,0:T(1,128)}', space=vmem, size = 0x12000, scoped, tag = 'internal scratch']
  #allocation2 [shape = 'f32[4,1]{1,0:T(4,128)}', space=vmem, size = 0x800, scoped, tag = 'scratch operand']
  #allocation3 [shape = 'f32[4,1]{1,0:T(4,128)}', space=vmem, size = 0x800, scoped, tag = 'scratch operand']
  #allocation4 [shape = 'f32[4,1]{1,0:T(4,128)}', space=vmem, size = 0x800, scoped, tag = 'scratch operand']
  #allocation5 [shape = 'f32[4,1]{1,0:T(4,128)}', space=vmem, size = 0x800, scoped, tag = 'scratch operand']
  %s0 = inlined_call_operand.vmem [shape: f32[2,4,512], index: 0, kind: input, shape index: {}]
  %s1 = inlined_call_operand.vmem [shape: f32[1,4,4], index: 1, kind: output, shape index: {}]
  %s2 = sld [smem:[#allocation0]]
  $region22: #{complex_batchnorm3d.2} parent=0
    _
  %s4 = ssub.s32 1, %s2
  %s5 = scalar_select 0, %s4, %s2
  // Predicated region
  $region2: #{complex_batchnorm3d.2} parent=0 // pred_check
    _
  $region3: #{complex_batchnorm3d.2} parent=0 // pred_check_branch
    %7 = sbr.rel (0) target = $region5
  $region4: #{complex_batchnorm3d.2} parent=0 // pred_region
    %s8 = sadd.s32 0, 0
    %s9 = smul.u32 4, %s8
    %p10 = scmp.lt.s32.totalorder %s9, 3
    %s11 = scalar_select %p10, %s9, 3
    %s12 = smul.addr %s11, 4
    %s13 = scalar_lea.vmem %s0, %s12
    %s14 = sadd.s32 0, 0
    %s15 = smul.u32 4, %s14
  $region5: #{complex_batchnorm3d.2} parent=0 // pred_fallthru
    _
  %s16 = sadd.s32 0, 0
  %s17 = smul.u32 4, %s16
  %p18 = scmp.lt.s32.totalorder %s17, 3
  %s19 = scalar_select %p18, %s17, 3
  %s20 = smul.addr %s19, 4
  %s21 = scalar_lea.vmem %s0, %s20
  %s22 = sadd.s32 0, 0
  %s23 = smul.u32 4, %s22
  %p24 = scmp.lt.s32.totalorder %s23, 3
  %s25 = scalar_select %p24, %s23, 3
  %s26 = smul.addr %s25, 4
  %s27 = scalar_lea.vmem %s0, %s26
  %s28 = sadd.s32 0, 0
  %s29 = smul.u32 4, %s28
  %p30 = scmp.eq.s32.totalorder 0, 0
  %p31 = scmp.eq.s32.totalorder 0, 0
  %p32 = pnand %p30, %p31
  %p33 = pneg %p32
  // Predicated region
  $region6: #{complex_batchnorm3d.2} parent=0 // pred_check
    _
  $region7: #{complex_batchnorm3d.2} parent=0 // pred_check_branch
    %35 = sbr.rel (%p32) target = $region9
  $region8: #{complex_batchnorm3d.2} parent=0 // pred_region
    %vm36 = vcmask 3072
    %37 = vst.msk [vmem:[#allocation2] sm:$0xf] %vm36, 0.0
    %38 = vst.msk [vmem:[#allocation3] sm:$0xf] %vm36, 0.0
    %39 = vst.msk [vmem:[#allocation4] sm:$0xf] %vm36, 0.0
    %40 = vst.msk [vmem:[#allocation5] sm:$0xf] %vm36, 0.0
  $region9: #{complex_batchnorm3d.2} parent=0 // pred_fallthru
    _
  %v41 = vlaneseq
  %v42 = vand.u32 %v41, 127
  %v43 = vadd.s32 %v42, 128
  %v44 = vadd.s32 %v42, 256
  %v45 = vadd.s32 %v42, 384
  %s46 = sadd.s32 0, 0
  %s47 = smul.u32 %s46, 512
  %v48 = vstv %s47
  %v49 = vadd.s32 %v42, %v48
  %v50 = vadd.s32 %v43, %v48
  %v51 = vadd.s32 %v44, %v48
  %v52 = vadd.s32 %v45, %v48
  %vm53 = vcmp.lt.s32.totalorder %v49, 512
  %vm54 = vcmp.lt.s32.totalorder %v50, 512
  %vm55 = vcmp.lt.s32.totalorder %v51, 512
  %vm56 = vcmp.lt.s32.totalorder %v52, 512
  %v57 = vand.u32 %v42, 1
  %v58 = vand.u32 %v43, 1
  %v59 = vand.u32 %v44, 1
  %v60 = vand.u32 %v45, 1
  %vm61 = vcmp.eq.s32.totalorder %v57, 0
  %vm62 = vcmp.eq.s32.totalorder %v58, 0
  %vm63 = vcmp.eq.s32.totalorder %v59, 0
  %vm64 = vcmp.eq.s32.totalorder %v60, 0
  %v65 = vld [vmem:[%s27] sm:$0xff]
  %v66 = vld [vmem:[%s27 + $0x8] sm:$0xff]
  %v69 = vcombine.high %v65, %v65
  %v70 = vcombine.high %v66, %v66
  %v73 = vsel %vm53, %v65, 0.0
  %v74 = vsel %vm54, %v69, 0.0
  %v75 = vsel %vm55, %v66, 0.0
  %v76 = vsel %vm56, %v70, 0.0
  %v77 = vsel %vm61, %v73, 0.0
  %v78 = vsel %vm62, %v74, 0.0
  %v79 = vsel %vm63, %v75, 0.0
  %v80 = vsel %vm64, %v76, 0.0
  %v81 = vsub.f32 %v73, %v77
  %v82 = vsub.f32 %v74, %v78
  %v83 = vsub.f32 %v75, %v79
  %v84 = vsub.f32 %v76, %v80
  %v85 = vld [vmem:[#allocation2] sm:$0xf]
  %vm86 = vcmask 1043456
  %v87 = vsel %vm86, %v77, 0.0
  %v88 = vsel %vm86, %v78, 0.0
  %v89 = vadd.f32 %v87, %v88
  %v90 = vsel %vm86, %v79, 0.0
  %v91 = vadd.f32 %v89, %v90
  %v92 = vsel %vm86, %v80, 0.0
  %v93 = vadd.f32 %v91, %v92
  %94 = vadd.xlane.f32.xlu0 %v93
  %v95 = vpop.xlane.xlu0 %94
  %v96 = vadd.f32 %v85, %v95
  %vm97 = vcmask 3072
  %98 = vst.msk [vmem:[#allocation2] sm:$0xf] %vm97, %v96
  %v99 = vld [vmem:[#allocation3] sm:$0xf]
  %v100 = vmul.f32 %v77, %v77
  %v101 = vmul.f32 %v78, %v78
  %v102 = vmul.f32 %v79, %v79
  %v103 = vmul.f32 %v80, %v80
  %v104 = vsel %vm86, %v100, 0.0
  %v105 = vsel %vm86, %v101, 0.0
  %v106 = vadd.f32 %v104, %v105
  %v107 = vsel %vm86, %v102, 0.0
  %v108 = vadd.f32 %v106, %v107
  %v109 = vsel %vm86, %v103, 0.0
  %v110 = vadd.f32 %v108, %v109
  %111 = vadd.xlane.f32.xlu0 %v110
  %v112 = vpop.xlane.xlu0 %111
  %v113 = vadd.f32 %v99, %v112
  %114 = vst.msk [vmem:[#allocation3] sm:$0xf] %vm97, %v113
  %v115 = vld [vmem:[#allocation4] sm:$0xf]
  %v116 = vsel %vm86, %v81, 0.0
  %v117 = vsel %vm86, %v82, 0.0
  %v118 = vadd.f32 %v116, %v117
  %v119 = vsel %vm86, %v83, 0.0
  %v120 = vadd.f32 %v118, %v119
  %v121 = vsel %vm86, %v84, 0.0
  %v122 = vadd.f32 %v120, %v121
  %123 = vadd.xlane.f32.xlu0 %v122
  %v124 = vpop.xlane.xlu0 %123
  %v125 = vadd.f32 %v115, %v124
  %126 = vst.msk [vmem:[#allocation4] sm:$0xf] %vm97, %v125
  %v127 = vld [vmem:[#allocation5] sm:$0xf]
  %v128 = vmul.f32 %v81, %v81
  %v129 = vmul.f32 %v82, %v82
  %v130 = vmul.f32 %v83, %v83
  %v131 = vmul.f32 %v84, %v84
  %v132 = vsel %vm86, %v128, 0.0
  %v133 = vsel %vm86, %v129, 0.0
  %v134 = vadd.f32 %v132, %v133
  %v135 = vsel %vm86, %v130, 0.0
  %v136 = vadd.f32 %v134, %v135
  %v137 = vsel %vm86, %v131, 0.0
  %v138 = vadd.f32 %v136, %v137
  %139 = vadd.xlane.f32.xlu0 %v138
  %v140 = vpop.xlane.xlu0 %139
  %v141 = vadd.f32 %v127, %v140
  %142 = vst.msk [vmem:[#allocation5] sm:$0xf] %vm97, %v141
  %s143 = scalar_lea.vmem %s27, 16
  %v144 = vld [vmem:[%s143] sm:$0xff]
  %v145 = vld [vmem:[%s143 + $0x8] sm:$0xff]
  %v148 = vcombine.high %v144, %v144
  %v149 = vcombine.high %v145, %v145
  %v152 = vsel %vm53, %v144, 0.0
  %v153 = vsel %vm54, %v148, 0.0
  %v154 = vsel %vm55, %v145, 0.0
  %v155 = vsel %vm56, %v149, 0.0
  %v156 = vsel %vm61, %v152, 0.0
  %v157 = vsel %vm62, %v153, 0.0
  %v158 = vsel %vm63, %v154, 0.0
  %v159 = vsel %vm64, %v155, 0.0
  %v160 = vsub.f32 %v152, %v156
  %v161 = vsub.f32 %v153, %v157
  %v162 = vsub.f32 %v154, %v158
  %v163 = vsub.f32 %v155, %v159
  %v164 = vld [vmem:[#allocation2] sm:$0xf]
  %v165 = vsel %vm86, %v156, 0.0
  %v166 = vsel %vm86, %v157, 0.0
  %v167 = vadd.f32 %v165, %v166
  %v168 = vsel %vm86, %v158, 0.0
  %v169 = vadd.f32 %v167, %v168
  %v170 = vsel %vm86, %v159, 0.0
  %v171 = vadd.f32 %v169, %v170
  %172 = vadd.xlane.f32.xlu0 %v171
  %v173 = vpop.xlane.xlu0 %172
  %v174 = vadd.f32 %v164, %v173
  %175 = vst.msk [vmem:[#allocation2] sm:$0xf] %vm97, %v174
  %v176 = vld [vmem:[#allocation3] sm:$0xf]
  %v177 = vmul.f32 %v156, %v156
  %v178 = vmul.f32 %v157, %v157
  %v179 = vmul.f32 %v158, %v158
  %v180 = vmul.f32 %v159, %v159
  %v181 = vsel %vm86, %v177, 0.0
  %v182 = vsel %vm86, %v178, 0.0
  %v183 = vadd.f32 %v181, %v182
  %v184 = vsel %vm86, %v179, 0.0
  %v185 = vadd.f32 %v183, %v184
  %v186 = vsel %vm86, %v180, 0.0
  %v187 = vadd.f32 %v185, %v186
  %188 = vadd.xlane.f32.xlu0 %v187
  %v189 = vpop.xlane.xlu0 %188
  %v190 = vadd.f32 %v176, %v189
  %191 = vst.msk [vmem:[#allocation3] sm:$0xf] %vm97, %v190
  %v192 = vld [vmem:[#allocation4] sm:$0xf]
  %v193 = vsel %vm86, %v160, 0.0
  %v194 = vsel %vm86, %v161, 0.0
  %v195 = vadd.f32 %v193, %v194
  %v196 = vsel %vm86, %v162, 0.0
  %v197 = vadd.f32 %v195, %v196
  %v198 = vsel %vm86, %v163, 0.0
  %v199 = vadd.f32 %v197, %v198
  %200 = vadd.xlane.f32.xlu0 %v199
  %v201 = vpop.xlane.xlu0 %200
  %v202 = vadd.f32 %v192, %v201
  %203 = vst.msk [vmem:[#allocation4] sm:$0xf] %vm97, %v202
  %v204 = vld [vmem:[#allocation5] sm:$0xf]
  %v205 = vmul.f32 %v160, %v160
  %v206 = vmul.f32 %v161, %v161
  %v207 = vmul.f32 %v162, %v162
  %v208 = vmul.f32 %v163, %v163
  %v209 = vsel %vm86, %v205, 0.0
  %v210 = vsel %vm86, %v206, 0.0
  %v211 = vadd.f32 %v209, %v210
  %v212 = vsel %vm86, %v207, 0.0
  %v213 = vadd.f32 %v211, %v212
  %v214 = vsel %vm86, %v208, 0.0
  %v215 = vadd.f32 %v213, %v214
  %216 = vadd.xlane.f32.xlu0 %v215
  %v217 = vpop.xlane.xlu0 %216
  %v218 = vadd.f32 %v204, %v217
  %219 = vst.msk [vmem:[#allocation5] sm:$0xf] %vm97, %v218
  // Predicated region
  $region10: #{complex_batchnorm3d.2} parent=0 // pred_check
    _
  $region11: #{complex_batchnorm3d.2} parent=0 // pred_check_branch
    %221 = sbr.rel (%p32) target = $region13
  $region12: #{complex_batchnorm3d.2} parent=0 // pred_region
    %v222 = vld [vmem:[#allocation2] sm:$0xf]
    %v223 = vld [vmem:[#allocation3] sm:$0xf]
    %v224 = vld [vmem:[#allocation4] sm:$0xf]
    %v225 = vld [vmem:[#allocation5] sm:$0xf]
    %227 = vrot.lane.b32.xlu0 %v223, 1
    %v228 = vpop.permute.xlu0 %227
    %231 = vrot.lane.b32.xlu0 %v224, 2
    %v232 = vpop.permute.xlu0 %231
    %235 = vrot.lane.b32.xlu0 %v225, 3
    %v236 = vpop.permute.xlu0 %235
    %vm238 = vcmask 7168
    %v239 = vsel %vm238, %v222, %v228
    %vm240 = vcmask 15360
    %v241 = vsel %vm240, %v239, %v232
    %vm242 = vcmask 23552
    %v243 = vsel %vm242, %v241, %v236
    %vm244 = vcmask 27648
    %245 = vst.msk [vmem:[%s1] sm:$0xf] %vm244, %v243
  $region13: #{complex_batchnorm3d.2} parent=0 // pred_fallthru
    _
  // Predicated region
  $region14: #{complex_batchnorm3d.2} parent=0 // pred_check
    _
  $region15: #{complex_batchnorm3d.2} parent=0 // pred_check_branch
    %247 = sbr.rel (0) target = $region17
  $region16: #{complex_batchnorm3d.2} parent=0 // pred_region
    _
  $region17: #{complex_batchnorm3d.2} parent=0 // pred_fallthru
    _
  // Predicated region
  $region18: #{complex_batchnorm3d.2} parent=0 // pred_check
    _
  $region19: #{complex_batchnorm3d.2} parent=0 // pred_check_branch
    %249 = sbr.rel (0) target = $region21
  $region20: #{complex_batchnorm3d.2} parent=0 // pred_region
    _
  $region21: #{complex_batchnorm3d.2} parent=0 // pred_fallthru
    _

// kernel: custom-call.2
$region0: #{custom-call.2}
  %s0 = inlined_call_operand.vmem [shape: f32[2,4,4,8,8], index: 0, kind: input, shape index: {}]
  %s1 = inlined_call_operand.vmem [shape: f32[2,4,4,8,8], index: 1, kind: input, shape index: {}]
  %s2 = inlined_call_operand.vmem [shape: c64[2,4,4,8,8], index: 2, kind: output, shape index: {}]
  %s4 = scalar_lea.vmem %s2, 512
  %v5 = vld [vmem:[%s0] sm:$0xff]
  %6 = vst [vmem:[%s2] sm:$0xff] %v5
  %s7 = scalar_lea.vmem %s2, 8
  %s8 = scalar_lea.vmem %s0, 8
  %v9 = vld [vmem:[%s8] sm:$0xff]
  %10 = vst [vmem:[%s7] sm:$0xff] %v9
  %s11 = scalar_lea.vmem %s2, 16
  %s12 = scalar_lea.vmem %s0, 16
  %v13 = vld [vmem:[%s12] sm:$0xff]
  %14 = vst [vmem:[%s11] sm:$0xff] %v13
  %s15 = scalar_lea.vmem %s2, 24
  %s16 = scalar_lea.vmem %s0, 24
  %v17 = vld [vmem:[%s16] sm:$0xff]
  %18 = vst [vmem:[%s15] sm:$0xff] %v17
  %s19 = scalar_lea.vmem %s2, 32
  %s20 = scalar_lea.vmem %s0, 32
  %v21 = vld [vmem:[%s20] sm:$0xff]
  %22 = vst [vmem:[%s19] sm:$0xff] %v21
  %s23 = scalar_lea.vmem %s2, 40
  %s24 = scalar_lea.vmem %s0, 40
  %v25 = vld [vmem:[%s24] sm:$0xff]
  %26 = vst [vmem:[%s23] sm:$0xff] %v25
  %s27 = scalar_lea.vmem %s2, 48
  %s28 = scalar_lea.vmem %s0, 48
  %v29 = vld [vmem:[%s28] sm:$0xff]
  %30 = vst [vmem:[%s27] sm:$0xff] %v29
  %s31 = scalar_lea.vmem %s2, 56
  %s32 = scalar_lea.vmem %s0, 56
  %v33 = vld [vmem:[%s32] sm:$0xff]
  %34 = vst [vmem:[%s31] sm:$0xff] %v33
  %s35 = scalar_lea.vmem %s2, 64
  %s36 = scalar_lea.vmem %s0, 64
  %v37 = vld [vmem:[%s36] sm:$0xff]
  %38 = vst [vmem:[%s35] sm:$0xff] %v37
  %s39 = scalar_lea.vmem %s2, 72
  %s40 = scalar_lea.vmem %s0, 72
  %v41 = vld [vmem:[%s40] sm:$0xff]
  %42 = vst [vmem:[%s39] sm:$0xff] %v41
  %s43 = scalar_lea.vmem %s2, 80
  %s44 = scalar_lea.vmem %s0, 80
  %v45 = vld [vmem:[%s44] sm:$0xff]
  %46 = vst [vmem:[%s43] sm:$0xff] %v45
  %s47 = scalar_lea.vmem %s2, 88
  %s48 = scalar_lea.vmem %s0, 88
  %v49 = vld [vmem:[%s48] sm:$0xff]
  %50 = vst [vmem:[%s47] sm:$0xff] %v49
  %s51 = scalar_lea.vmem %s2, 96
  %s52 = scalar_lea.vmem %s0, 96
  %v53 = vld [vmem:[%s52] sm:$0xff]
  %54 = vst [vmem:[%s51] sm:$0xff] %v53
  %s55 = scalar_lea.vmem %s2, 104
  %s56 = scalar_lea.vmem %s0, 104
  %v57 = vld [vmem:[%s56] sm:$0xff]
  %58 = vst [vmem:[%s55] sm:$0xff] %v57
  %s59 = scalar_lea.vmem %s2, 112
  %s60 = scalar_lea.vmem %s0, 112
  %v61 = vld [vmem:[%s60] sm:$0xff]
  %62 = vst [vmem:[%s59] sm:$0xff] %v61
  %s63 = scalar_lea.vmem %s2, 120
  %s64 = scalar_lea.vmem %s0, 120
  %v65 = vld [vmem:[%s64] sm:$0xff]
  %66 = vst [vmem:[%s63] sm:$0xff] %v65
  %s67 = scalar_lea.vmem %s2, 128
  %s68 = scalar_lea.vmem %s0, 128
  %v69 = vld [vmem:[%s68] sm:$0xff]
  %70 = vst [vmem:[%s67] sm:$0xff] %v69
  %s71 = scalar_lea.vmem %s2, 136
  %s72 = scalar_lea.vmem %s0, 136
  %v73 = vld [vmem:[%s72] sm:$0xff]
  %74 = vst [vmem:[%s71] sm:$0xff] %v73
  %s75 = scalar_lea.vmem %s2, 144
  %s76 = scalar_lea.vmem %s0, 144
  %v77 = vld [vmem:[%s76] sm:$0xff]
  %78 = vst [vmem:[%s75] sm:$0xff] %v77
  %s79 = scalar_lea.vmem %s2, 152
  %s80 = scalar_lea.vmem %s0, 152
  %v81 = vld [vmem:[%s80] sm:$0xff]
  %82 = vst [vmem:[%s79] sm:$0xff] %v81
  %s83 = scalar_lea.vmem %s2, 160
  %s84 = scalar_lea.vmem %s0, 160
  %v85 = vld [vmem:[%s84] sm:$0xff]
  %86 = vst [vmem:[%s83] sm:$0xff] %v85
  %s87 = scalar_lea.vmem %s2, 168
  %s88 = scalar_lea.vmem %s0, 168
  %v89 = vld [vmem:[%s88] sm:$0xff]
  %90 = vst [vmem:[%s87] sm:$0xff] %v89
  %s91 = scalar_lea.vmem %s2, 176
  %s92 = scalar_lea.vmem %s0, 176
  %v93 = vld [vmem:[%s92] sm:$0xff]
  %94 = vst [vmem:[%s91] sm:$0xff] %v93
  %s95 = scalar_lea.vmem %s2, 184
  %s96 = scalar_lea.vmem %s0, 184
  %v97 = vld [vmem:[%s96] sm:$0xff]
  %98 = vst [vmem:[%s95] sm:$0xff] %v97
  %s99 = scalar_lea.vmem %s2, 192
  %s100 = scalar_lea.vmem %s0, 192
  %v101 = vld [vmem:[%s100] sm:$0xff]
  %102 = vst [vmem:[%s99] sm:$0xff] %v101
  %s103 = scalar_lea.vmem %s2, 200
  %s104 = scalar_lea.vmem %s0, 200
  %v105 = vld [vmem:[%s104] sm:$0xff]
  %106 = vst [vmem:[%s103] sm:$0xff] %v105
  %s107 = scalar_lea.vmem %s2, 208
  %s108 = scalar_lea.vmem %s0, 208
  %v109 = vld [vmem:[%s108] sm:$0xff]
  %110 = vst [vmem:[%s107] sm:$0xff] %v109
  %s111 = scalar_lea.vmem %s2, 216
  %s112 = scalar_lea.vmem %s0, 216
  %v113 = vld [vmem:[%s112] sm:$0xff]
  %114 = vst [vmem:[%s111] sm:$0xff] %v113
  %s115 = scalar_lea.vmem %s2, 224
  %s116 = scalar_lea.vmem %s0, 224
  %v117 = vld [vmem:[%s116] sm:$0xff]
  %118 = vst [vmem:[%s115] sm:$0xff] %v117
  %s119 = scalar_lea.vmem %s2, 232
  %s120 = scalar_lea.vmem %s0, 232
  %v121 = vld [vmem:[%s120] sm:$0xff]
  %122 = vst [vmem:[%s119] sm:$0xff] %v121
  %s123 = scalar_lea.vmem %s2, 240
  %s124 = scalar_lea.vmem %s0, 240
  %v125 = vld [vmem:[%s124] sm:$0xff]
  %126 = vst [vmem:[%s123] sm:$0xff] %v125
  %s127 = scalar_lea.vmem %s2, 248
  %s128 = scalar_lea.vmem %s0, 248
  %v129 = vld [vmem:[%s128] sm:$0xff]
  %130 = vst [vmem:[%s127] sm:$0xff] %v129
  %s131 = scalar_lea.vmem %s2, 256
  %s132 = scalar_lea.vmem %s0, 256
  %v133 = vld [vmem:[%s132] sm:$0xff]
  %134 = vst [vmem:[%s131] sm:$0xff] %v133
  %s135 = scalar_lea.vmem %s2, 264
  %s136 = scalar_lea.vmem %s0, 264
  %v137 = vld [vmem:[%s136] sm:$0xff]
  %138 = vst [vmem:[%s135] sm:$0xff] %v137
  %s139 = scalar_lea.vmem %s2, 272
  %s140 = scalar_lea.vmem %s0, 272
  %v141 = vld [vmem:[%s140] sm:$0xff]
  %142 = vst [vmem:[%s139] sm:$0xff] %v141
  %s143 = scalar_lea.vmem %s2, 280
  %s144 = scalar_lea.vmem %s0, 280
  %v145 = vld [vmem:[%s144] sm:$0xff]
  %146 = vst [vmem:[%s143] sm:$0xff] %v145
  %s147 = scalar_lea.vmem %s2, 288
  %s148 = scalar_lea.vmem %s0, 288
  %v149 = vld [vmem:[%s148] sm:$0xff]
  %150 = vst [vmem:[%s147] sm:$0xff] %v149
  %s151 = scalar_lea.vmem %s2, 296
  %s152 = scalar_lea.vmem %s0, 296
  %v153 = vld [vmem:[%s152] sm:$0xff]
  %154 = vst [vmem:[%s151] sm:$0xff] %v153
  %s155 = scalar_lea.vmem %s2, 304
  %s156 = scalar_lea.vmem %s0, 304
  %v157 = vld [vmem:[%s156] sm:$0xff]
  %158 = vst [vmem:[%s155] sm:$0xff] %v157
  %s159 = scalar_lea.vmem %s2, 312
  %s160 = scalar_lea.vmem %s0, 312
  %v161 = vld [vmem:[%s160] sm:$0xff]
  %162 = vst [vmem:[%s159] sm:$0xff] %v161
  %s163 = scalar_lea.vmem %s2, 320
  %s164 = scalar_lea.vmem %s0, 320
  %v165 = vld [vmem:[%s164] sm:$0xff]
  %166 = vst [vmem:[%s163] sm:$0xff] %v165
  %s167 = scalar_lea.vmem %s2, 328
  %s168 = scalar_lea.vmem %s0, 328
  %v169 = vld [vmem:[%s168] sm:$0xff]
  %170 = vst [vmem:[%s167] sm:$0xff] %v169
  %s171 = scalar_lea.vmem %s2, 336
  %s172 = scalar_lea.vmem %s0, 336
  %v173 = vld [vmem:[%s172] sm:$0xff]
  %174 = vst [vmem:[%s171] sm:$0xff] %v173
  %s175 = scalar_lea.vmem %s2, 344
  %s176 = scalar_lea.vmem %s0, 344
  %v177 = vld [vmem:[%s176] sm:$0xff]
  %178 = vst [vmem:[%s175] sm:$0xff] %v177
  %s179 = scalar_lea.vmem %s2, 352
  %s180 = scalar_lea.vmem %s0, 352
  %v181 = vld [vmem:[%s180] sm:$0xff]
  %182 = vst [vmem:[%s179] sm:$0xff] %v181
  %s183 = scalar_lea.vmem %s2, 360
  %s184 = scalar_lea.vmem %s0, 360
  %v185 = vld [vmem:[%s184] sm:$0xff]
  %186 = vst [vmem:[%s183] sm:$0xff] %v185
  %s187 = scalar_lea.vmem %s2, 368
  %s188 = scalar_lea.vmem %s0, 368
  %v189 = vld [vmem:[%s188] sm:$0xff]
  %190 = vst [vmem:[%s187] sm:$0xff] %v189
  %s191 = scalar_lea.vmem %s2, 376
  %s192 = scalar_lea.vmem %s0, 376
  %v193 = vld [vmem:[%s192] sm:$0xff]
  %194 = vst [vmem:[%s191] sm:$0xff] %v193
  %s195 = scalar_lea.vmem %s2, 384
  %s196 = scalar_lea.vmem %s0, 384
  %v197 = vld [vmem:[%s196] sm:$0xff]
  %198 = vst [vmem:[%s195] sm:$0xff] %v197
  %s199 = scalar_lea.vmem %s2, 392
  %s200 = scalar_lea.vmem %s0, 392
  %v201 = vld [vmem:[%s200] sm:$0xff]
  %202 = vst [vmem:[%s199] sm:$0xff] %v201
  %s203 = scalar_lea.vmem %s2, 400
  %s204 = scalar_lea.vmem %s0, 400
  %v205 = vld [vmem:[%s204] sm:$0xff]
  %206 = vst [vmem:[%s203] sm:$0xff] %v205
  %s207 = scalar_lea.vmem %s2, 408
  %s208 = scalar_lea.vmem %s0, 408
  %v209 = vld [vmem:[%s208] sm:$0xff]
  %210 = vst [vmem:[%s207] sm:$0xff] %v209
  %s211 = scalar_lea.vmem %s2, 416
  %s212 = scalar_lea.vmem %s0, 416
  %v213 = vld [vmem:[%s212] sm:$0xff]
  %214 = vst [vmem:[%s211] sm:$0xff] %v213
  %s215 = scalar_lea.vmem %s2, 424
  %s216 = scalar_lea.vmem %s0, 424
  %v217 = vld [vmem:[%s216] sm:$0xff]
  %218 = vst [vmem:[%s215] sm:$0xff] %v217
  %s219 = scalar_lea.vmem %s2, 432
  %s220 = scalar_lea.vmem %s0, 432
  %v221 = vld [vmem:[%s220] sm:$0xff]
  %222 = vst [vmem:[%s219] sm:$0xff] %v221
  %s223 = scalar_lea.vmem %s2, 440
  %s224 = scalar_lea.vmem %s0, 440
  %v225 = vld [vmem:[%s224] sm:$0xff]
  %226 = vst [vmem:[%s223] sm:$0xff] %v225
  %s227 = scalar_lea.vmem %s2, 448
  %s228 = scalar_lea.vmem %s0, 448
  %v229 = vld [vmem:[%s228] sm:$0xff]
  %230 = vst [vmem:[%s227] sm:$0xff] %v229
  %s231 = scalar_lea.vmem %s2, 456
  %s232 = scalar_lea.vmem %s0, 456
  %v233 = vld [vmem:[%s232] sm:$0xff]
  %234 = vst [vmem:[%s231] sm:$0xff] %v233
  %s235 = scalar_lea.vmem %s2, 464
  %s236 = scalar_lea.vmem %s0, 464
  %v237 = vld [vmem:[%s236] sm:$0xff]
  %238 = vst [vmem:[%s235] sm:$0xff] %v237
  %s239 = scalar_lea.vmem %s2, 472
  %s240 = scalar_lea.vmem %s0, 472
  %v241 = vld [vmem:[%s240] sm:$0xff]
  %242 = vst [vmem:[%s239] sm:$0xff] %v241
  %s243 = scalar_lea.vmem %s2, 480
  %s244 = scalar_lea.vmem %s0, 480
  %v245 = vld [vmem:[%s244] sm:$0xff]
  %246 = vst [vmem:[%s243] sm:$0xff] %v245
  %s247 = scalar_lea.vmem %s2, 488
  %s248 = scalar_lea.vmem %s0, 488
  %v249 = vld [vmem:[%s248] sm:$0xff]
  %250 = vst [vmem:[%s247] sm:$0xff] %v249
  %s251 = scalar_lea.vmem %s2, 496
  %s252 = scalar_lea.vmem %s0, 496
  %v253 = vld [vmem:[%s252] sm:$0xff]
  %254 = vst [vmem:[%s251] sm:$0xff] %v253
  %s255 = scalar_lea.vmem %s2, 504
  %s256 = scalar_lea.vmem %s0, 504
  %v257 = vld [vmem:[%s256] sm:$0xff]
  %258 = vst [vmem:[%s255] sm:$0xff] %v257
  %v259 = vld [vmem:[%s1] sm:$0xff]
  %260 = vst [vmem:[%s4] sm:$0xff] %v259
  %s261 = scalar_lea.vmem %s4, 8
  %s262 = scalar_lea.vmem %s1, 8
  %v263 = vld [vmem:[%s262] sm:$0xff]
  %264 = vst [vmem:[%s261] sm:$0xff] %v263
  %s265 = scalar_lea.vmem %s4, 16
  %s266 = scalar_lea.vmem %s1, 16
  %v267 = vld [vmem:[%s266] sm:$0xff]
  %268 = vst [vmem:[%s265] sm:$0xff] %v267
  %s269 = scalar_lea.vmem %s4, 24
  %s270 = scalar_lea.vmem %s1, 24
  %v271 = vld [vmem:[%s270] sm:$0xff]
  %272 = vst [vmem:[%s269] sm:$0xff] %v271
  %s273 = scalar_lea.vmem %s4, 32
  %s274 = scalar_lea.vmem %s1, 32
  %v275 = vld [vmem:[%s274] sm:$0xff]
  %276 = vst [vmem:[%s273] sm:$0xff] %v275
  %s277 = scalar_lea.vmem %s4, 40
  %s278 = scalar_lea.vmem %s1, 40
  %v279 = vld [vmem:[%s278] sm:$0xff]
  %280 = vst [vmem:[%s277] sm:$0xff] %v279
  %s281 = scalar_lea.vmem %s4, 48
  %s282 = scalar_lea.vmem %s1, 48
  %v283 = vld [vmem:[%s282] sm:$0xff]
  %284 = vst [vmem:[%s281] sm:$0xff] %v283
  %s285 = scalar_lea.vmem %s4, 56
  %s286 = scalar_lea.vmem %s1, 56
  %v287 = vld [vmem:[%s286] sm:$0xff]
  %288 = vst [vmem:[%s285] sm:$0xff] %v287
  %s289 = scalar_lea.vmem %s4, 64
  %s290 = scalar_lea.vmem %s1, 64
  %v291 = vld [vmem:[%s290] sm:$0xff]
  %292 = vst [vmem:[%s289] sm:$0xff] %v291
  %s293 = scalar_lea.vmem %s4, 72
  %s294 = scalar_lea.vmem %s1, 72
  %v295 = vld [vmem:[%s294] sm:$0xff]
  %296 = vst [vmem:[%s293] sm:$0xff] %v295
  %s297 = scalar_lea.vmem %s4, 80
  %s298 = scalar_lea.vmem %s1, 80
  %v299 = vld [vmem:[%s298] sm:$0xff]
  %300 = vst [vmem:[%s297] sm:$0xff] %v299
  %s301 = scalar_lea.vmem %s4, 88
  %s302 = scalar_lea.vmem %s1, 88
  %v303 = vld [vmem:[%s302] sm:$0xff]
  %304 = vst [vmem:[%s301] sm:$0xff] %v303
  %s305 = scalar_lea.vmem %s4, 96
  %s306 = scalar_lea.vmem %s1, 96
  %v307 = vld [vmem:[%s306] sm:$0xff]
  %308 = vst [vmem:[%s305] sm:$0xff] %v307
  %s309 = scalar_lea.vmem %s4, 104
  %s310 = scalar_lea.vmem %s1, 104
  %v311 = vld [vmem:[%s310] sm:$0xff]
  %312 = vst [vmem:[%s309] sm:$0xff] %v311
  %s313 = scalar_lea.vmem %s4, 112
  %s314 = scalar_lea.vmem %s1, 112
  %v315 = vld [vmem:[%s314] sm:$0xff]
  %316 = vst [vmem:[%s313] sm:$0xff] %v315
  %s317 = scalar_lea.vmem %s4, 120
  %s318 = scalar_lea.vmem %s1, 120
  %v319 = vld [vmem:[%s318] sm:$0xff]
  %320 = vst [vmem:[%s317] sm:$0xff] %v319
  %s321 = scalar_lea.vmem %s4, 128
  %s322 = scalar_lea.vmem %s1, 128
  %v323 = vld [vmem:[%s322] sm:$0xff]
  %324 = vst [vmem:[%s321] sm:$0xff] %v323
  %s325 = scalar_lea.vmem %s4, 136
  %s326 = scalar_lea.vmem %s1, 136
  %v327 = vld [vmem:[%s326] sm:$0xff]
  %328 = vst [vmem:[%s325] sm:$0xff] %v327
  %s329 = scalar_lea.vmem %s4, 144
  %s330 = scalar_lea.vmem %s1, 144
  %v331 = vld [vmem:[%s330] sm:$0xff]
  %332 = vst [vmem:[%s329] sm:$0xff] %v331
  %s333 = scalar_lea.vmem %s4, 152
  %s334 = scalar_lea.vmem %s1, 152
  %v335 = vld [vmem:[%s334] sm:$0xff]
  %336 = vst [vmem:[%s333] sm:$0xff] %v335
  %s337 = scalar_lea.vmem %s4, 160
  %s338 = scalar_lea.vmem %s1, 160
  %v339 = vld [vmem:[%s338] sm:$0xff]
  %340 = vst [vmem:[%s337] sm:$0xff] %v339
  %s341 = scalar_lea.vmem %s4, 168
  %s342 = scalar_lea.vmem %s1, 168
  %v343 = vld [vmem:[%s342] sm:$0xff]
  %344 = vst [vmem:[%s341] sm:$0xff] %v343
  %s345 = scalar_lea.vmem %s4, 176
  %s346 = scalar_lea.vmem %s1, 176
  %v347 = vld [vmem:[%s346] sm:$0xff]
  %348 = vst [vmem:[%s345] sm:$0xff] %v347
  %s349 = scalar_lea.vmem %s4, 184
  %s350 = scalar_lea.vmem %s1, 184
  %v351 = vld [vmem:[%s350] sm:$0xff]
  %352 = vst [vmem:[%s349] sm:$0xff] %v351
  %s353 = scalar_lea.vmem %s4, 192
  %s354 = scalar_lea.vmem %s1, 192
  %v355 = vld [vmem:[%s354] sm:$0xff]
  %356 = vst [vmem:[%s353] sm:$0xff] %v355
  %s357 = scalar_lea.vmem %s4, 200
  %s358 = scalar_lea.vmem %s1, 200
  %v359 = vld [vmem:[%s358] sm:$0xff]
  %360 = vst [vmem:[%s357] sm:$0xff] %v359
  %s361 = scalar_lea.vmem %s4, 208
  %s362 = scalar_lea.vmem %s1, 208
  %v363 = vld [vmem:[%s362] sm:$0xff]
  %364 = vst [vmem:[%s361] sm:$0xff] %v363
  %s365 = scalar_lea.vmem %s4, 216
  %s366 = scalar_lea.vmem %s1, 216
  %v367 = vld [vmem:[%s366] sm:$0xff]
  %368 = vst [vmem:[%s365] sm:$0xff] %v367
  %s369 = scalar_lea.vmem %s4, 224
  %s370 = scalar_lea.vmem %s1, 224
  %v371 = vld [vmem:[%s370] sm:$0xff]
  %372 = vst [vmem:[%s369] sm:$0xff] %v371
  %s373 = scalar_lea.vmem %s4, 232
  %s374 = scalar_lea.vmem %s1, 232
  %v375 = vld [vmem:[%s374] sm:$0xff]
  %376 = vst [vmem:[%s373] sm:$0xff] %v375
  %s377 = scalar_lea.vmem %s4, 240
  %s378 = scalar_lea.vmem %s1, 240
  %v379 = vld [vmem:[%s378] sm:$0xff]
  %380 = vst [vmem:[%s377] sm:$0xff] %v379
  %s381 = scalar_lea.vmem %s4, 248
  %s382 = scalar_lea.vmem %s1, 248
  %v383 = vld [vmem:[%s382] sm:$0xff]
  %384 = vst [vmem:[%s381] sm:$0xff] %v383
  %s385 = scalar_lea.vmem %s4, 256
  %s386 = scalar_lea.vmem %s1, 256
  %v387 = vld [vmem:[%s386] sm:$0xff]
  %388 = vst [vmem:[%s385] sm:$0xff] %v387
  %s389 = scalar_lea.vmem %s4, 264
  %s390 = scalar_lea.vmem %s1, 264
  %v391 = vld [vmem:[%s390] sm:$0xff]
  %392 = vst [vmem:[%s389] sm:$0xff] %v391
  %s393 = scalar_lea.vmem %s4, 272
  %s394 = scalar_lea.vmem %s1, 272
  %v395 = vld [vmem:[%s394] sm:$0xff]
  %396 = vst [vmem:[%s393] sm:$0xff] %v395
  %s397 = scalar_lea.vmem %s4, 280
  %s398 = scalar_lea.vmem %s1, 280
  %v399 = vld [vmem:[%s398] sm:$0xff]
  %400 = vst [vmem:[%s397] sm:$0xff] %v399
  %s401 = scalar_lea.vmem %s4, 288
  %s402 = scalar_lea.vmem %s1, 288
  %v403 = vld [vmem:[%s402] sm:$0xff]
  %404 = vst [vmem:[%s401] sm:$0xff] %v403
  %s405 = scalar_lea.vmem %s4, 296
  %s406 = scalar_lea.vmem %s1, 296
  %v407 = vld [vmem:[%s406] sm:$0xff]
  %408 = vst [vmem:[%s405] sm:$0xff] %v407
  %s409 = scalar_lea.vmem %s4, 304
  %s410 = scalar_lea.vmem %s1, 304
  %v411 = vld [vmem:[%s410] sm:$0xff]
  %412 = vst [vmem:[%s409] sm:$0xff] %v411
  %s413 = scalar_lea.vmem %s4, 312
  %s414 = scalar_lea.vmem %s1, 312
  %v415 = vld [vmem:[%s414] sm:$0xff]
  %416 = vst [vmem:[%s413] sm:$0xff] %v415
  %s417 = scalar_lea.vmem %s4, 320
  %s418 = scalar_lea.vmem %s1, 320
  %v419 = vld [vmem:[%s418] sm:$0xff]
  %420 = vst [vmem:[%s417] sm:$0xff] %v419
  %s421 = scalar_lea.vmem %s4, 328
  %s422 = scalar_lea.vmem %s1, 328
  %v423 = vld [vmem:[%s422] sm:$0xff]
  %424 = vst [vmem:[%s421] sm:$0xff] %v423
  %s425 = scalar_lea.vmem %s4, 336
  %s426 = scalar_lea.vmem %s1, 336
  %v427 = vld [vmem:[%s426] sm:$0xff]
  %428 = vst [vmem:[%s425] sm:$0xff] %v427
  %s429 = scalar_lea.vmem %s4, 344
  %s430 = scalar_lea.vmem %s1, 344
  %v431 = vld [vmem:[%s430] sm:$0xff]
  %432 = vst [vmem:[%s429] sm:$0xff] %v431
  %s433 = scalar_lea.vmem %s4, 352
  %s434 = scalar_lea.vmem %s1, 352
  %v435 = vld [vmem:[%s434] sm:$0xff]
  %436 = vst [vmem:[%s433] sm:$0xff] %v435
  %s437 = scalar_lea.vmem %s4, 360
  %s438 = scalar_lea.vmem %s1, 360
  %v439 = vld [vmem:[%s438] sm:$0xff]
  %440 = vst [vmem:[%s437] sm:$0xff] %v439
  %s441 = scalar_lea.vmem %s4, 368
  %s442 = scalar_lea.vmem %s1, 368
  %v443 = vld [vmem:[%s442] sm:$0xff]
  %444 = vst [vmem:[%s441] sm:$0xff] %v443
  %s445 = scalar_lea.vmem %s4, 376
  %s446 = scalar_lea.vmem %s1, 376
  %v447 = vld [vmem:[%s446] sm:$0xff]
  %448 = vst [vmem:[%s445] sm:$0xff] %v447
  %s449 = scalar_lea.vmem %s4, 384
  %s450 = scalar_lea.vmem %s1, 384
  %v451 = vld [vmem:[%s450] sm:$0xff]
  %452 = vst [vmem:[%s449] sm:$0xff] %v451
  %s453 = scalar_lea.vmem %s4, 392
  %s454 = scalar_lea.vmem %s1, 392
  %v455 = vld [vmem:[%s454] sm:$0xff]
  %456 = vst [vmem:[%s453] sm:$0xff] %v455
  %s457 = scalar_lea.vmem %s4, 400
  %s458 = scalar_lea.vmem %s1, 400
  %v459 = vld [vmem:[%s458] sm:$0xff]
  %460 = vst [vmem:[%s457] sm:$0xff] %v459
  %s461 = scalar_lea.vmem %s4, 408
  %s462 = scalar_lea.vmem %s1, 408
  %v463 = vld [vmem:[%s462] sm:$0xff]
  %464 = vst [vmem:[%s461] sm:$0xff] %v463
  %s465 = scalar_lea.vmem %s4, 416
  %s466 = scalar_lea.vmem %s1, 416
  %v467 = vld [vmem:[%s466] sm:$0xff]
  %468 = vst [vmem:[%s465] sm:$0xff] %v467
  %s469 = scalar_lea.vmem %s4, 424
  %s470 = scalar_lea.vmem %s1, 424
  %v471 = vld [vmem:[%s470] sm:$0xff]
  %472 = vst [vmem:[%s469] sm:$0xff] %v471
  %s473 = scalar_lea.vmem %s4, 432
  %s474 = scalar_lea.vmem %s1, 432
  %v475 = vld [vmem:[%s474] sm:$0xff]
  %476 = vst [vmem:[%s473] sm:$0xff] %v475
  %s477 = scalar_lea.vmem %s4, 440
  %s478 = scalar_lea.vmem %s1, 440
  %v479 = vld [vmem:[%s478] sm:$0xff]
  %480 = vst [vmem:[%s477] sm:$0xff] %v479
  %s481 = scalar_lea.vmem %s4, 448
  %s482 = scalar_lea.vmem %s1, 448
  %v483 = vld [vmem:[%s482] sm:$0xff]
  %484 = vst [vmem:[%s481] sm:$0xff] %v483
  %s485 = scalar_lea.vmem %s4, 456
  %s486 = scalar_lea.vmem %s1, 456
  %v487 = vld [vmem:[%s486] sm:$0xff]
  %488 = vst [vmem:[%s485] sm:$0xff] %v487
  %s489 = scalar_lea.vmem %s4, 464
  %s490 = scalar_lea.vmem %s1, 464
  %v491 = vld [vmem:[%s490] sm:$0xff]
  %492 = vst [vmem:[%s489] sm:$0xff] %v491
  %s493 = scalar_lea.vmem %s4, 472
  %s494 = scalar_lea.vmem %s1, 472
  %v495 = vld [vmem:[%s494] sm:$0xff]
  %496 = vst [vmem:[%s493] sm:$0xff] %v495
  %s497 = scalar_lea.vmem %s4, 480
  %s498 = scalar_lea.vmem %s1, 480
  %v499 = vld [vmem:[%s498] sm:$0xff]
  %500 = vst [vmem:[%s497] sm:$0xff] %v499
  %s501 = scalar_lea.vmem %s4, 488
  %s502 = scalar_lea.vmem %s1, 488
  %v503 = vld [vmem:[%s502] sm:$0xff]
  %504 = vst [vmem:[%s501] sm:$0xff] %v503
  %s505 = scalar_lea.vmem %s4, 496
  %s506 = scalar_lea.vmem %s1, 496
  %v507 = vld [vmem:[%s506] sm:$0xff]
  %508 = vst [vmem:[%s505] sm:$0xff] %v507
  %s509 = scalar_lea.vmem %s4, 504
  %s510 = scalar_lea.vmem %s1, 504
  %v511 = vld [vmem:[%s510] sm:$0xff]
  %512 = vst [vmem:[%s509] sm:$0xff] %v511

</llo_original>
